<compile_context>
chip_gen: v6e
topology: v6e:2x2x1
jax: 0.10.0
libtpu: 0.0.40
codegen_flags: <defaults>
</compile_context>

<pallas_src>
import functools

import jax
import jax.numpy as jnp
from jax.experimental import pallas as pl
from jax.experimental.pallas import tpu as pltpu


def _qnet_kernel(x_ref, w1_ref, b1_ref, w2_ref, b2_ref, w3_ref, b3_ref, q_ref):
    """Fused MLP Q-network forward for one batch tile.

    bf16 MXU matmuls with f32 accumulation; bias-add / ReLU epilogues in f32.
    Weights and biases are whole-array blocks (constant index_map), so they
    stay resident in VMEM across grid steps; only x / q tiles stream.
    """
    h = jnp.dot(x_ref[...], w1_ref[...], preferred_element_type=jnp.float32)
    h = jnp.maximum(h + b1_ref[...], 0.0)

    h = jnp.dot(h.astype(w2_ref.dtype), w2_ref[...],
                preferred_element_type=jnp.float32)
    h = jnp.maximum(h + b2_ref[...], 0.0)

    q = jnp.dot(h.astype(w3_ref.dtype), w3_ref[...],
                preferred_element_type=jnp.float32)
    q_ref[...] = (q + b3_ref[...]).astype(q_ref.dtype)


def _round_up(n, m):
    return ((n + m - 1) // m) * m


@functools.partial(jax.jit, static_argnames=("action_dim", "tile_batch"))
def hyperbolic_q_forward(x, params, *, action_dim, tile_batch=512):
    """Batch-tiled, lane-dense, bf16-streamed forward pass."""
    w1, b1, w2, b2, w3, b3 = params
    batch, state_dim = x.shape

    # bf16 for the streamed operand (x) and the MXU weight operands; biases
    # and all accumulation / epilogue math stay in f32.
    x_bf = x.astype(jnp.bfloat16)
    w1_bf = w1.astype(jnp.bfloat16)
    w2_bf = w2.astype(jnp.bfloat16)
    b1_f = b1.astype(jnp.float32)
    b2_f = b2.astype(jnp.float32)

    # Lane-dense output: pad the final layer's output features to a multiple
    # of 128 so the epilogue add and the store are unmasked (full-lane) ops.
    out_pad = _round_up(max(action_dim, 128), 128)
    w3_bf = jnp.pad(w3.astype(jnp.bfloat16),
                    ((0, 0), (0, out_pad - action_dim)))
    b3_p = jnp.pad(b3.astype(jnp.float32),
                   ((0, 0), (0, out_pad - action_dim)))

    # Batch tiling: sublane-aligned tile, batch padded up to a tile multiple.
    tb = _round_up(min(tile_batch, _round_up(batch, 8)), 8)
    padded_batch = _round_up(batch, tb)
    if padded_batch != batch:
        x_bf = jnp.pad(x_bf, ((0, padded_batch - batch), (0, 0)))

    grid = (padded_batch // tb,)

    def _const(i):  # weights/biases: same (whole) block every grid step
        return (0, 0)

    q_padded = pl.pallas_call(
        _qnet_kernel,
        out_shape=jax.ShapeDtypeStruct((padded_batch, out_pad), jnp.float32),
        grid=grid,
        in_specs=[
            pl.BlockSpec((tb, state_dim), lambda i: (i, 0)),  # x (streamed)
            pl.BlockSpec(w1_bf.shape, _const),
            pl.BlockSpec(b1_f.shape, _const),
            pl.BlockSpec(w2_bf.shape, _const),
            pl.BlockSpec(b2_f.shape, _const),
            pl.BlockSpec(w3_bf.shape, _const),
            pl.BlockSpec(b3_p.shape, _const),
        ],
        out_specs=pl.BlockSpec((tb, out_pad), lambda i: (i, 0)),
        compiler_params=pltpu.CompilerParams(
            dimension_semantics=("parallel",),
        ),
    )(x_bf, w1_bf, b1_f, w2_bf, b2_f, w3_bf, b3_p)

    return q_padded[:batch, :action_dim]


def init_params(key, state_dim, hidden_dims, action_dim):
    """nn.Linear-style init: U(-1/sqrt(fan_in), 1/sqrt(fan_in)).

    Weights stored as [in_features, out_features]; biases as [1, out_features]
    (kept 2-D so they map cleanly onto the (sublane, lane) vreg layout).
    """
    dims = [state_dim] + list(hidden_dims) + [action_dim]
    params = []
    for fan_in, fan_out in zip(dims[:-1], dims[1:]):
        key, kw, kb = jax.random.split(key, 3)
        bound = 1.0 / jnp.sqrt(float(fan_in))
        w = jax.random.uniform(kw, (fan_in, fan_out), jnp.float32, -bound, bound)
        b = jax.random.uniform(kb, (1, fan_out), jnp.float32, -bound, bound)
        params += [w, b]
    return tuple(params)


def reference_forward(x, params):
    """Pure-JAX reference mirroring the kernel's numerics (bf16 in, f32 acc)."""
    w1, b1, w2, b2, w3, b3 = params
    h = jnp.dot(x.astype(jnp.bfloat16), w1.astype(jnp.bfloat16),
                preferred_element_type=jnp.float32)
    h = jnp.maximum(h + b1, 0.0)
    h = jnp.dot(h.astype(jnp.bfloat16), w2.astype(jnp.bfloat16),
                preferred_element_type=jnp.float32)
    h = jnp.maximum(h + b2, 0.0)
    q = jnp.dot(h.astype(jnp.bfloat16), w3.astype(jnp.bfloat16),
                preferred_element_type=jnp.float32)
    return q + b3


if __name__ == "__main__":
    state_dim = 16
    hidden_dims = [32, 32]
    action_dim = 4
    batch = 64          # small, but exercises multiple grid steps
    tile_batch = 16     # -> grid = (4,)

    key = jax.random.PRNGKey(0)
    key, kx = jax.random.split(key)
    x = jax.random.normal(kx, (batch, state_dim), jnp.float32)
    params = init_params(key, state_dim, hidden_dims, action_dim)

    q = hyperbolic_q_forward(x, params, action_dim=action_dim,
                             tile_batch=tile_batch)
    q = jax.block_until_ready(q)

    q_ref = reference_forward(x, params)
    assert q.shape == (batch, action_dim)
    assert jnp.allclose(q, q_ref, atol=1e-2, rtol=1e-2), "mismatch vs reference"

    print("KERNEL_OK")
</pallas_src>

<mosaic_0001>
module attributes {stable_mosaic.version = 11 : i64} {
  func.func @_qnet_kernel(%arg0: i32, %arg1: memref<16x16xbf16, #tpu.memory_space<vmem>>, %arg2: memref<16x32xbf16, #tpu.memory_space<vmem>>, %arg3: memref<1x32xf32, #tpu.memory_space<vmem>>, %arg4: memref<32x32xbf16, #tpu.memory_space<vmem>>, %arg5: memref<1x32xf32, #tpu.memory_space<vmem>>, %arg6: memref<32x128xbf16, #tpu.memory_space<vmem>>, %arg7: memref<1x128xf32, #tpu.memory_space<vmem>>, %arg8: memref<16x128xf32, #tpu.memory_space<vmem>>) attributes {dimension_semantics = [#tpu.dimension_semantics<parallel>], iteration_bounds = array<i64: 4>, scalar_prefetch = 0 : i64, scratch_operands = 0 : i64, tpu.core_type = #tpu.core_type<tc>, window_params = [{transform_indices = @transform_0, window_bounds = array<i64: 16, 16>}, {pipeline_mode = #tpu.pipeline_mode<synchronous>, transform_indices = @transform_1, window_bounds = array<i64: 16, 32>}, {pipeline_mode = #tpu.pipeline_mode<synchronous>, transform_indices = @transform_2, window_bounds = array<i64: 1, 32>}, {pipeline_mode = #tpu.pipeline_mode<synchronous>, transform_indices = @transform_3, window_bounds = array<i64: 32, 32>}, {pipeline_mode = #tpu.pipeline_mode<synchronous>, transform_indices = @transform_4, window_bounds = array<i64: 1, 32>}, {pipeline_mode = #tpu.pipeline_mode<synchronous>, transform_indices = @transform_5, window_bounds = array<i64: 32, 128>}, {pipeline_mode = #tpu.pipeline_mode<synchronous>, transform_indices = @transform_6, window_bounds = array<i64: 1, 128>}, {transform_indices = @transform_7, window_bounds = array<i64: 16, 128>}]} {
    %c0 = arith.constant 0 : index
    %c0_0 = arith.constant 0 : index
    %0 = vector.load %arg1[%c0, %c0_0] : memref<16x16xbf16, #tpu.memory_space<vmem>>, vector<16x16xbf16>
    %c0_1 = arith.constant 0 : index
    %c0_2 = arith.constant 0 : index
    %1 = vector.load %arg2[%c0_1, %c0_2] : memref<16x32xbf16, #tpu.memory_space<vmem>>, vector<16x32xbf16>
    %cst = arith.constant dense<0.000000e+00> : vector<16x32xf32>
    %2 = tpu.matmul %0, %1, %cst {dimension_numbers = #tpu.dot_dimension_numbers<[1], [0], [0], [1], [0, 0, 1, 1], [], []>} : vector<16x16xbf16>, vector<16x32xbf16>, vector<16x32xf32> -> vector<16x32xf32>
    %c0_3 = arith.constant 0 : index
    %c0_4 = arith.constant 0 : index
    %3 = vector.load %arg3[%c0_3, %c0_4] : memref<1x32xf32, #tpu.memory_space<vmem>>, vector<1x32xf32>
    %4 = vector.broadcast %3 : vector<1x32xf32> to vector<16x32xf32>
    %5 = arith.addf %2, %4 : vector<16x32xf32>
    %cst_5 = arith.constant 0.000000e+00 : f32
    %6 = vector.broadcast %cst_5 : f32 to vector<16x32xf32>
    %7 = arith.maximumf %5, %6 : vector<16x32xf32>
    %8 = arith.truncf %7 : vector<16x32xf32> to vector<16x32xbf16>
    %c0_6 = arith.constant 0 : index
    %c0_7 = arith.constant 0 : index
    %9 = vector.load %arg4[%c0_6, %c0_7] : memref<32x32xbf16, #tpu.memory_space<vmem>>, vector<32x32xbf16>
    %cst_8 = arith.constant dense<0.000000e+00> : vector<16x32xf32>
    %10 = tpu.matmul %8, %9, %cst_8 {dimension_numbers = #tpu.dot_dimension_numbers<[1], [0], [0], [1], [0, 0, 1, 1], [], []>} : vector<16x32xbf16>, vector<32x32xbf16>, vector<16x32xf32> -> vector<16x32xf32>
    %c0_9 = arith.constant 0 : index
    %c0_10 = arith.constant 0 : index
    %11 = vector.load %arg5[%c0_9, %c0_10] : memref<1x32xf32, #tpu.memory_space<vmem>>, vector<1x32xf32>
    %12 = vector.broadcast %11 : vector<1x32xf32> to vector<16x32xf32>
    %13 = arith.addf %10, %12 : vector<16x32xf32>
    %cst_11 = arith.constant 0.000000e+00 : f32
    %14 = vector.broadcast %cst_11 : f32 to vector<16x32xf32>
    %15 = arith.maximumf %13, %14 : vector<16x32xf32>
    %16 = arith.truncf %15 : vector<16x32xf32> to vector<16x32xbf16>
    %c0_12 = arith.constant 0 : index
    %c0_13 = arith.constant 0 : index
    %17 = vector.load %arg6[%c0_12, %c0_13] : memref<32x128xbf16, #tpu.memory_space<vmem>>, vector<32x128xbf16>
    %cst_14 = arith.constant dense<0.000000e+00> : vector<16x128xf32>
    %18 = tpu.matmul %16, %17, %cst_14 {dimension_numbers = #tpu.dot_dimension_numbers<[1], [0], [0], [1], [0, 0, 1, 1], [], []>} : vector<16x32xbf16>, vector<32x128xbf16>, vector<16x128xf32> -> vector<16x128xf32>
    %c0_15 = arith.constant 0 : index
    %c0_16 = arith.constant 0 : index
    %19 = vector.load %arg7[%c0_15, %c0_16] : memref<1x128xf32, #tpu.memory_space<vmem>>, vector<1x128xf32>
    %20 = vector.broadcast %19 : vector<1x128xf32> to vector<16x128xf32>
    %21 = arith.addf %18, %20 : vector<16x128xf32>
    %c0_17 = arith.constant 0 : index
    %c0_18 = arith.constant 0 : index
    %22 = vector.load %arg8[%c0_17, %c0_18] : memref<16x128xf32, #tpu.memory_space<vmem>>, vector<16x128xf32>
    tpu.vector_store %arg8[%c0_17, %c0_18], %21 {strides = array<i32>} : memref<16x128xf32, #tpu.memory_space<vmem>>, vector<16x128xf32>,
    return
  }
  func.func @transform_0(%arg0: i32) -> (i32, i32) {
    %c0_i32 = arith.constant 0 : i32
    %c0_i32_0 = arith.constant 0 : i32
    return %arg0, %c0_i32 : i32, i32
  }
  func.func @transform_1(%arg0: i32) -> (i32, i32) {
    %c0_i32 = arith.constant 0 : i32
    %c0_i32_0 = arith.constant 0 : i32
    %c0_i32_1 = arith.constant 0 : i32
    return %c0_i32, %c0_i32_0 : i32, i32
  }
  func.func @transform_2(%arg0: i32) -> (i32, i32) {
    %c0_i32 = arith.constant 0 : i32
    %c0_i32_0 = arith.constant 0 : i32
    %c0_i32_1 = arith.constant 0 : i32
    return %c0_i32, %c0_i32_0 : i32, i32
  }
  func.func @transform_3(%arg0: i32) -> (i32, i32) {
    %c0_i32 = arith.constant 0 : i32
    %c0_i32_0 = arith.constant 0 : i32
    %c0_i32_1 = arith.constant 0 : i32
    return %c0_i32, %c0_i32_0 : i32, i32
  }
  func.func @transform_4(%arg0: i32) -> (i32, i32) {
    %c0_i32 = arith.constant 0 : i32
    %c0_i32_0 = arith.constant 0 : i32
    %c0_i32_1 = arith.constant 0 : i32
    return %c0_i32, %c0_i32_0 : i32, i32
  }
  func.func @transform_5(%arg0: i32) -> (i32, i32) {
    %c0_i32 = arith.constant 0 : i32
    %c0_i32_0 = arith.constant 0 : i32
    %c0_i32_1 = arith.constant 0 : i32
    return %c0_i32, %c0_i32_0 : i32, i32
  }
  func.func @transform_6(%arg0: i32) -> (i32, i32) {
    %c0_i32 = arith.constant 0 : i32
    %c0_i32_0 = arith.constant 0 : i32
    %c0_i32_1 = arith.constant 0 : i32
    return %c0_i32, %c0_i32_0 : i32, i32
  }
  func.func @transform_7(%arg0: i32) -> (i32, i32) {
    %c0_i32 = arith.constant 0 : i32
    %c0_i32_0 = arith.constant 0 : i32
    return %arg0, %c0_i32 : i32, i32
  }
}

</mosaic_0001>

<llo_original>
// kernel: hyperbolic_q_forward.1
$region0: #{hyperbolic_q_forward.1}
  #allocation0 [shape = 'u32[]', space=smem, size = 0x4, offset = 0x4, fixed_abs, tag = 'smem constant byte address 0x4 - core index']
  #allocation1 [shape = 'u32[144,128]{1,0:T(1,128)}', space=vmem, size = 0x12000, scoped, tag = 'internal scratch']
  %s0 = inlined_call_operand.vmem [shape: bf16[64,16], index: 0, kind: input, shape index: {}]
  %s1 = inlined_call_operand.vmem [shape: bf16[16,32], index: 1, kind: input, shape index: {}]
  %s2 = inlined_call_operand.vmem [shape: f32[1,32], index: 2, kind: input, shape index: {}]
  %s3 = inlined_call_operand.vmem [shape: bf16[32,32], index: 3, kind: input, shape index: {}]
  %s4 = inlined_call_operand.vmem [shape: f32[1,32], index: 4, kind: input, shape index: {}]
  %s5 = inlined_call_operand.vmem [shape: bf16[32,128], index: 5, kind: input, shape index: {}]
  %s6 = inlined_call_operand.vmem [shape: f32[1,128], index: 6, kind: input, shape index: {}]
  %s7 = inlined_call_operand.vmem [shape: f32[64,128], index: 7, kind: output, shape index: {}]
  %s8 = sld [smem:[#allocation0]]
  $region61: #{hyperbolic_q_forward.1} parent=0
    _
  %s10 = ssub.s32 1, %s8
  %s11 = scalar_select 0, %s10, %s8
  loop: start=0, step=1, limit=6
  $region2: #{hyperbolic_q_forward.1} parent=0 // loop_pre_header
    _
  $region3: #{hyperbolic_q_forward.1} parent=0 // loop_header
    %s13 = sphi 0, %s17
    %p14 = scmp.ge.s32.totalorder %s13, 6
    %s23 = sphi 0, %s25
    %s26 = sphi 0, %s23
    %s27 = sphi 0, %s26
    %s43 = sphi 0, %s27
    %s47 = sphi 0, %s47
    %s49 = sphi 0, %s47
    %s50 = sphi 0, %s49
    %s64 = sphi 0, %s50
    %s68 = sphi 0, %s68
    %s70 = sphi 0, %s68
    %s71 = sphi 0, %s70
    %s85 = sphi 0, %s71
    %s89 = sphi 0, %s89
    %s91 = sphi 0, %s89
    %s92 = sphi 0, %s91
    %s106 = sphi 0, %s92
    %s110 = sphi 0, %s110
    %s112 = sphi 0, %s110
    %s113 = sphi 0, %s112
    %s127 = sphi 0, %s113
    %s131 = sphi 0, %s131
    %s133 = sphi 0, %s131
    %s134 = sphi 0, %s133
    %s148 = sphi 0, %s134
    %s152 = sphi 0, %s152
    %s154 = sphi 0, %s152
    %s155 = sphi 0, %s154
    %s169 = sphi 0, %s155
    %s175 = sphi 0, %s177
    %s178 = sphi 0, %s175
    %s179 = sphi 0, %s178
    %s195 = sphi 0, %s179
  $region4: #{hyperbolic_q_forward.1} parent=0 // loop_header_branch
    %16 = sbr.rel (%p14) target = $region8
  $region5: #{hyperbolic_q_forward.1} parent=0 // loop_body
    %s18 = ssub.s32 %s13, 1
    %s19 = ssub.s32 %s13, 2
    %s20 = sadd.s32 %s13, 1
    %s21 = ssub.s32 %s13, %s20
    %p22 = scmp.eq.s32.totalorder %s21, 0
    %s24 = sadd.s32 %s23, 1
    %s25 = scalar_select %p22, %s23, %s24
    %p28 = pneg %p22
    %p29 = scmp.eq.s32.totalorder %s13, 3
    %p30 = por %p28, %p29
    %p31 = scmp.ne.s32.totalorder %s23, %s26
    %p32 = scmp.eq.s32.totalorder %s13, 0
    %p33 = por %p31, %p32
    %p34 = scmp.ne.s32.totalorder %s23, %s26
    %p35 = scmp.eq.s32.totalorder %s18, 3
    %p36 = por %p34, %p35
    %p37 = scmp.ne.s32.totalorder %s26, %s27
    %p38 = scmp.eq.s32.totalorder %s18, 0
    %p39 = por %p37, %p38
    %p40 = scmp.ne.s32.totalorder %s26, %s27
    %p41 = scmp.eq.s32.totalorder %s19, 3
    %p42 = por %p40, %p41
    %p44 = scmp.ne.s32.totalorder %s27, %s43
    %p45 = scmp.eq.s32.totalorder %s19, 0
    %p46 = por %p44, %p45
    %s48 = sadd.s32 %s47, 1
    %p51 = scmp.eq.s32.totalorder %s13, 3
    %p52 = scmp.ne.s32.totalorder %s47, %s49
    %p53 = scmp.eq.s32.totalorder %s13, 0
    %p54 = por %p52, %p53
    %p55 = scmp.ne.s32.totalorder %s47, %s49
    %p56 = scmp.eq.s32.totalorder %s18, 3
    %p57 = por %p55, %p56
    %p58 = scmp.ne.s32.totalorder %s49, %s50
    %p59 = scmp.eq.s32.totalorder %s18, 0
    %p60 = por %p58, %p59
    %p61 = scmp.ne.s32.totalorder %s49, %s50
    %p62 = scmp.eq.s32.totalorder %s19, 3
    %p63 = por %p61, %p62
    %p65 = scmp.ne.s32.totalorder %s50, %s64
    %p66 = scmp.eq.s32.totalorder %s19, 0
    %p67 = por %p65, %p66
    %s69 = sadd.s32 %s68, 1
    %p72 = scmp.eq.s32.totalorder %s13, 3
    %p73 = scmp.ne.s32.totalorder %s68, %s70
    %p74 = scmp.eq.s32.totalorder %s13, 0
    %p75 = por %p73, %p74
    %p76 = scmp.ne.s32.totalorder %s68, %s70
    %p77 = scmp.eq.s32.totalorder %s18, 3
    %p78 = por %p76, %p77
    %p79 = scmp.ne.s32.totalorder %s70, %s71
    %p80 = scmp.eq.s32.totalorder %s18, 0
    %p81 = por %p79, %p80
    %p82 = scmp.ne.s32.totalorder %s70, %s71
    %p83 = scmp.eq.s32.totalorder %s19, 3
    %p84 = por %p82, %p83
    %p86 = scmp.ne.s32.totalorder %s71, %s85
    %p87 = scmp.eq.s32.totalorder %s19, 0
    %p88 = por %p86, %p87
    %s90 = sadd.s32 %s89, 1
    %p93 = scmp.eq.s32.totalorder %s13, 3
    %p94 = scmp.ne.s32.totalorder %s89, %s91
    %p95 = scmp.eq.s32.totalorder %s13, 0
    %p96 = por %p94, %p95
    %p97 = scmp.ne.s32.totalorder %s89, %s91
    %p98 = scmp.eq.s32.totalorder %s18, 3
    %p99 = por %p97, %p98
    %p100 = scmp.ne.s32.totalorder %s91, %s92
    %p101 = scmp.eq.s32.totalorder %s18, 0
    %p102 = por %p100, %p101
    %p103 = scmp.ne.s32.totalorder %s91, %s92
    %p104 = scmp.eq.s32.totalorder %s19, 3
    %p105 = por %p103, %p104
    %p107 = scmp.ne.s32.totalorder %s92, %s106
    %p108 = scmp.eq.s32.totalorder %s19, 0
    %p109 = por %p107, %p108
    %s111 = sadd.s32 %s110, 1
    %p114 = scmp.eq.s32.totalorder %s13, 3
    %p115 = scmp.ne.s32.totalorder %s110, %s112
    %p116 = scmp.eq.s32.totalorder %s13, 0
    %p117 = por %p115, %p116
    %p118 = scmp.ne.s32.totalorder %s110, %s112
    %p119 = scmp.eq.s32.totalorder %s18, 3
    %p120 = por %p118, %p119
    %p121 = scmp.ne.s32.totalorder %s112, %s113
    %p122 = scmp.eq.s32.totalorder %s18, 0
    %p123 = por %p121, %p122
    %p124 = scmp.ne.s32.totalorder %s112, %s113
    %p125 = scmp.eq.s32.totalorder %s19, 3
    %p126 = por %p124, %p125
    %p128 = scmp.ne.s32.totalorder %s113, %s127
    %p129 = scmp.eq.s32.totalorder %s19, 0
    %p130 = por %p128, %p129
    %s132 = sadd.s32 %s131, 1
    %p135 = scmp.eq.s32.totalorder %s13, 3
    %p136 = scmp.ne.s32.totalorder %s131, %s133
    %p137 = scmp.eq.s32.totalorder %s13, 0
    %p138 = por %p136, %p137
    %p139 = scmp.ne.s32.totalorder %s131, %s133
    %p140 = scmp.eq.s32.totalorder %s18, 3
    %p141 = por %p139, %p140
    %p142 = scmp.ne.s32.totalorder %s133, %s134
    %p143 = scmp.eq.s32.totalorder %s18, 0
    %p144 = por %p142, %p143
    %p145 = scmp.ne.s32.totalorder %s133, %s134
    %p146 = scmp.eq.s32.totalorder %s19, 3
    %p147 = por %p145, %p146
    %p149 = scmp.ne.s32.totalorder %s134, %s148
    %p150 = scmp.eq.s32.totalorder %s19, 0
    %p151 = por %p149, %p150
    %s153 = sadd.s32 %s152, 1
    %p156 = scmp.eq.s32.totalorder %s13, 3
    %p157 = scmp.ne.s32.totalorder %s152, %s154
    %p158 = scmp.eq.s32.totalorder %s13, 0
    %p159 = por %p157, %p158
    %p160 = scmp.ne.s32.totalorder %s152, %s154
    %p161 = scmp.eq.s32.totalorder %s18, 3
    %p162 = por %p160, %p161
    %p163 = scmp.ne.s32.totalorder %s154, %s155
    %p164 = scmp.eq.s32.totalorder %s18, 0
    %p165 = por %p163, %p164
    %p166 = scmp.ne.s32.totalorder %s154, %s155
    %p167 = scmp.eq.s32.totalorder %s19, 3
    %p168 = por %p166, %p167
    %p170 = scmp.ne.s32.totalorder %s155, %s169
    %p171 = scmp.eq.s32.totalorder %s19, 0
    %p172 = por %p170, %p171
    %s173 = ssub.s32 %s13, %s20
    %p174 = scmp.eq.s32.totalorder %s173, 0
    %s176 = sadd.s32 %s175, 1
    %s177 = scalar_select %p174, %s175, %s176
    %p180 = pneg %p174
    %p181 = scmp.eq.s32.totalorder %s13, 3
    %p182 = por %p180, %p181
    %p183 = scmp.ne.s32.totalorder %s175, %s178
    %p184 = scmp.eq.s32.totalorder %s13, 0
    %p185 = por %p183, %p184
    %p186 = scmp.ne.s32.totalorder %s175, %s178
    %p187 = scmp.eq.s32.totalorder %s18, 3
    %p188 = por %p186, %p187
    %p189 = scmp.ne.s32.totalorder %s178, %s179
    %p190 = scmp.eq.s32.totalorder %s18, 0
    %p191 = por %p189, %p190
    %p192 = scmp.ne.s32.totalorder %s178, %s179
    %p193 = scmp.eq.s32.totalorder %s19, 3
    %p194 = por %p192, %p193
    %p196 = scmp.ne.s32.totalorder %s179, %s195
    %p197 = scmp.eq.s32.totalorder %s19, 0
    %p198 = por %p196, %p197
    %p199 = scmp.le.s32.totalorder 1, %s13
    %p200 = scmp.lt.s32.totalorder %s13, 5
    %p201 = pnand %p199, %p200
    %p202 = pneg %p201
    // Predicated region
    $region9: #{hyperbolic_q_forward.1} parent=5 // pred_check
      _
    $region10: #{hyperbolic_q_forward.1} parent=5 // pred_check_branch
      %204 = sbr.rel (%p201) target = $region12
    $region11: #{hyperbolic_q_forward.1} parent=5 // pred_region
      %s205 = ssub.s32 %s13, 1
      // Predicated region
      $region13: #{hyperbolic_q_forward.1} parent=11 // pred_check
        %p206 = pneg %p60
      $region14: #{hyperbolic_q_forward.1} parent=11 // pred_check_branch
        %208 = sbr.rel (%p206) target = $region16
      $region15: #{hyperbolic_q_forward.1} parent=11 // pred_region
        _
      $region16: #{hyperbolic_q_forward.1} parent=11 // pred_fallthru
        _
      // Predicated region
      $region17: #{hyperbolic_q_forward.1} parent=11 // pred_check
        %p209 = pneg %p81
      $region18: #{hyperbolic_q_forward.1} parent=11 // pred_check_branch
        %211 = sbr.rel (%p209) target = $region20
      $region19: #{hyperbolic_q_forward.1} parent=11 // pred_region
        _
      $region20: #{hyperbolic_q_forward.1} parent=11 // pred_fallthru
        _
      // Predicated region
      $region21: #{hyperbolic_q_forward.1} parent=11 // pred_check
        %p212 = pneg %p102
      $region22: #{hyperbolic_q_forward.1} parent=11 // pred_check_branch
        %214 = sbr.rel (%p212) target = $region24
      $region23: #{hyperbolic_q_forward.1} parent=11 // pred_region
        _
      $region24: #{hyperbolic_q_forward.1} parent=11 // pred_fallthru
        _
      // Predicated region
      $region25: #{hyperbolic_q_forward.1} parent=11 // pred_check
        %p215 = pneg %p123
      $region26: #{hyperbolic_q_forward.1} parent=11 // pred_check_branch
        %217 = sbr.rel (%p215) target = $region28
      $region27: #{hyperbolic_q_forward.1} parent=11 // pred_region
        _
      $region28: #{hyperbolic_q_forward.1} parent=11 // pred_fallthru
        _
      // Predicated region
      $region29: #{hyperbolic_q_forward.1} parent=11 // pred_check
        %p218 = pneg %p144
      $region30: #{hyperbolic_q_forward.1} parent=11 // pred_check_branch
        %220 = sbr.rel (%p218) target = $region32
      $region31: #{hyperbolic_q_forward.1} parent=11 // pred_region
        _
      $region32: #{hyperbolic_q_forward.1} parent=11 // pred_fallthru
        _
      // Predicated region
      $region33: #{hyperbolic_q_forward.1} parent=11 // pred_check
        %p221 = pneg %p165
      $region34: #{hyperbolic_q_forward.1} parent=11 // pred_check_branch
        %223 = sbr.rel (%p221) target = $region36
      $region35: #{hyperbolic_q_forward.1} parent=11 // pred_region
        _
      $region36: #{hyperbolic_q_forward.1} parent=11 // pred_fallthru
        _
    $region12: #{hyperbolic_q_forward.1} parent=5 // pred_fallthru
      _
    %p224 = scmp.lt.s32.totalorder %s13, 4
    // Predicated region
    $region37: #{hyperbolic_q_forward.1} parent=5 // pred_check
      %p225 = pneg %p224
    $region38: #{hyperbolic_q_forward.1} parent=5 // pred_check_branch
      %227 = sbr.rel (%p225) target = $region40
    $region39: #{hyperbolic_q_forward.1} parent=5 // pred_region
      // Predicated region
      $region41: #{hyperbolic_q_forward.1} parent=39 // pred_check
        %p228 = pneg %p33
      $region42: #{hyperbolic_q_forward.1} parent=39 // pred_check_branch
        %230 = sbr.rel (%p228) target = $region44
      $region43: #{hyperbolic_q_forward.1} parent=39 // pred_region
        %s231 = smul.u32 2, %s13
        %p232 = scmp.lt.s32.totalorder %s231, 7
        %s233 = scalar_select %p232, %s231, 7
        %s234 = smul.addr %s233, 4
        %s235 = scalar_lea.vmem %s0, %s234
        %s236 = smul.u32 2, %s13
      $region44: #{hyperbolic_q_forward.1} parent=39 // pred_fallthru
        _
    $region40: #{hyperbolic_q_forward.1} parent=5 // pred_fallthru
      _
    %p237 = scmp.le.s32.totalorder 1, %s13
    %p238 = scmp.lt.s32.totalorder %s13, 5
    %p239 = pnand %p237, %p238
    %p240 = pneg %p239
    // Predicated region
    $region45: #{hyperbolic_q_forward.1} parent=5 // pred_check
      _
    $region46: #{hyperbolic_q_forward.1} parent=5 // pred_check_branch
      %242 = sbr.rel (%p239) target = $region48
    $region47: #{hyperbolic_q_forward.1} parent=5 // pred_region
      %s243 = ssub.s32 %s13, 1
      %s244 = smul.u32 2, %s18
      %p245 = scmp.lt.s32.totalorder %s244, 7
      %s246 = scalar_select %p245, %s244, 7
      %s247 = smul.addr %s246, 4
      %s248 = scalar_lea.vmem %s0, %s247
      %p249 = pneg %p39
      %p250 = pneg %p36
      %p251 = pneg %p60
      %p252 = pneg %p57
      %p253 = pneg %p81
      %p254 = pneg %p78
      %p255 = pneg %p102
      %p256 = pneg %p99
      %p257 = pneg %p123
      %p258 = pneg %p120
      %p259 = pneg %p144
      %p260 = pneg %p141
      %p261 = pneg %p165
      %p262 = pneg %p162
      %p263 = pneg %p191
      %p264 = pneg %p188
      %s265 = smul.u32 2, %s18
      %p266 = scmp.lt.s32.totalorder %s265, 7
      %s267 = scalar_select %p266, %s265, 7
      %s268 = smul.addr %s267, 8
      %s269 = scalar_lea.vmem %s7, %s268
      %s270 = smul.u32 2, %s18
      %p271 = scmp.lt.s32.totalorder %s270, 7
      %s272 = scalar_select %p271, %s270, 7
      %s273 = smul.addr %s272, 4
      %s274 = scalar_lea.vmem %s0, %s273
      %s275 = smul.u32 2, %s18
      %s276 = smul.u32 2, %s18
      %p277 = scmp.lt.s32.totalorder %s276, 7
      %s278 = scalar_select %p277, %s276, 7
      %s279 = smul.addr %s278, 8
      %s280 = scalar_lea.vmem %s7, %s279
      %s281 = smul.u32 2, %s18
      %v283 = vld [vmem:[%s274] sm:$0xf]
      %v284 = vld [vmem:[%s274 + $0x4] sm:$0xf]
      %v285 = vld [vmem:[%s1] sm:$0xf]
      %v286 = vld [vmem:[%s1 + $0x4] sm:$0xf]
      %v287 = vld [vmem:[%s2] sm:$0x1]
      %v289 = vlaneseq
      %v290 = vshrl.u32 %v289, 7
      %v291 = vsub.s32 0, %v290
      %v292 = vrot.slane %v287, %v291
      %v296 = vunpack.c.l.b16 %v283
      %v297 = vunpack.c.l.b16 %v284
      %v298 = vpack.c.b16 %v297, %v296
      %v301 = vunpack.c.l.b16 %v285
      %v302 = vunpack.c.l.b16 %v286
      %v303 = vpack.c.b16 %v302, %v301
      %vm305 = vcmask 130048
      %v307 = vsel %vm305, %v298, 0
      %309 = vmatprep.subr.bf16.mxu0 0
      %310 = vmatpush1.bf16.msra.mxu0 0
      %311 = vmatprep.subr.bf16.mxu0 0
      %312 = vmatpush1.bf16.msra.mxu0 0
      %313 = vmatprep.subr.bf16.mxu0 0
      %314 = vmatpush1.bf16.msra.mxu0 0
      %315 = vmatprep.subr.bf16.mxu0 0
      %316 = vmatpush1.bf16.msra.mxu0 0
      %317 = vmatprep.subr.bf16.mxu0 0
      %318 = vmatpush1.bf16.msra.mxu0 0
      %319 = vmatprep.subr.bf16.mxu0 0
      %320 = vmatpush1.bf16.msra.mxu0 0
      %321 = vmatprep.subr.bf16.mxu0 0
      %322 = vmatpush1.bf16.msra.mxu0 0
      %323 = vmatprep.subr.bf16.mxu0 0
      %324 = vmatpush1.bf16.msra.mxu0 %v303
      %325 = vmatprep.subr.bf16.mxu0 0
      %326 = vmatpush2.bf16.msra.mxu0 0
      %327 = vmatprep.subr.bf16.mxu0 0
      %328 = vmatpush2.bf16.msra.mxu0 0
      %329 = vmatprep.subr.bf16.mxu0 0
      %330 = vmatpush2.bf16.msra.mxu0 0
      %331 = vmatprep.subr.bf16.mxu0 0
      %332 = vmatpush2.bf16.msra.mxu0 0
      %333 = vmatprep.subr.bf16.mxu0 0
      %334 = vmatpush2.bf16.msra.mxu0 0
      %335 = vmatprep.subr.bf16.mxu0 0
      %336 = vmatpush2.bf16.msra.mxu0 0
      %337 = vmatprep.subr.bf16.mxu0 0
      %338 = vmatpush2.bf16.msra.mxu0 0
      %339 = vmatprep.subr.bf16.mxu0 0
      %340 = vmatpush2.bf16.msra.mxu0 0
      %341 = vmatprep.mubr.bf16.mxu0 0
      %342 = vmatmul.mubr.bf16.gmra.mxu0 %v307
      %v343 = vpop.f32.mrf.mxu0
      %v344 = vadd.f32 %v292, %v343
      %v345 = vpop.f32.mrf.mxu0
      %v346 = vpop.f32.mrf.mxu0
      %v347 = vadd.f32 %v292, %v346
      %v348 = vpop.f32.mrf.mxu0
      %349 = vdwg.mxu0
      %v350 = vmax.f32 %v344, 0.0
      %v351 = vmax.f32 %v347, 0.0
      %v352 = vpack.c.bf16 %v351, %v350
      %v353 = vld [vmem:[%s3] sm:$0xf]
      %v354 = vld [vmem:[%s3 + $0x4] sm:$0xf]
      %v355 = vld [vmem:[%s3 + $0x8] sm:$0xf]
      %v356 = vld [vmem:[%s3 + $0xc] sm:$0xf]
      %v357 = vld [vmem:[%s4] sm:$0x1]
      %v359 = vlaneseq
      %v360 = vshrl.u32 %v359, 7
      %v361 = vsub.s32 0, %v360
      %v362 = vrot.slane %v357, %v361
      %v368 = vunpack.c.l.b16 %v353
      %v369 = vunpack.c.l.b16 %v354
      %v370 = vunpack.c.l.b16 %v355
      %v371 = vunpack.c.l.b16 %v356
      %v372 = vpack.c.b16 %v369, %v368
      %v373 = vpack.c.b16 %v371, %v370
      %vm376 = vcmask 261120
      %v378 = vsel %vm376, %v352, 0
      %380 = vmatprep.subr.bf16.mxu0 0
      %381 = vmatpush1.bf16.msra.mxu0 0
      %382 = vmatprep.subr.bf16.mxu0 0
      %383 = vmatpush1.bf16.msra.mxu0 0
      %384 = vmatprep.subr.bf16.mxu0 0
      %385 = vmatpush1.bf16.msra.mxu0 0
      %386 = vmatprep.subr.bf16.mxu0 0
      %387 = vmatpush1.bf16.msra.mxu0 0
      %388 = vmatprep.subr.bf16.mxu0 0
      %389 = vmatpush1.bf16.msra.mxu0 0
      %390 = vmatprep.subr.bf16.mxu0 0
      %391 = vmatpush1.bf16.msra.mxu0 0
      %392 = vmatprep.subr.bf16.mxu0 0
      %393 = vmatpush1.bf16.msra.mxu0 %v373
      %394 = vmatprep.subr.bf16.mxu0 0
      %395 = vmatpush1.bf16.msra.mxu0 %v372
      %396 = vmatprep.subr.bf16.mxu0 0
      %397 = vmatpush2.bf16.msra.mxu0 0
      %398 = vmatprep.subr.bf16.mxu0 0
      %399 = vmatpush2.bf16.msra.mxu0 0
      %400 = vmatprep.subr.bf16.mxu0 0
      %401 = vmatpush2.bf16.msra.mxu0 0
      %402 = vmatprep.subr.bf16.mxu0 0
      %403 = vmatpush2.bf16.msra.mxu0 0
      %404 = vmatprep.subr.bf16.mxu0 0
      %405 = vmatpush2.bf16.msra.mxu0 0
      %406 = vmatprep.subr.bf16.mxu0 0
      %407 = vmatpush2.bf16.msra.mxu0 0
      %408 = vmatprep.subr.bf16.mxu0 0
      %409 = vmatpush2.bf16.msra.mxu0 0
      %410 = vmatprep.subr.bf16.mxu0 0
      %411 = vmatpush2.bf16.msra.mxu0 0
      %412 = vmatprep.mubr.bf16.mxu0 0
      %413 = vmatmul.mubr.bf16.gmra.mxu0 %v378
      %v414 = vpop.f32.mrf.mxu0
      %v415 = vadd.f32 %v362, %v414
      %v416 = vpop.f32.mrf.mxu0
      %v417 = vpop.f32.mrf.mxu0
      %v418 = vadd.f32 %v362, %v417
      %v419 = vpop.f32.mrf.mxu0
      %420 = vdwg.mxu0
      %v421 = vmax.f32 %v415, 0.0
      %v422 = vmax.f32 %v418, 0.0
      %v423 = vpack.c.bf16 %v422, %v421
      %v424 = vld [vmem:[%s5] sm:$0xf]
      %v425 = vld [vmem:[%s5 + $0x4] sm:$0xf]
      %v426 = vld [vmem:[%s5 + $0x8] sm:$0xf]
      %v427 = vld [vmem:[%s5 + $0xc] sm:$0xf]
      %v428 = vld [vmem:[%s6] sm:$0x1]
      %v430 = vlaneseq
      %v431 = vshrl.u32 %v430, 7
      %v432 = vsub.s32 0, %v431
      %v433 = vrot.slane %v428, %v432
      %v439 = vunpack.c.l.b16 %v424
      %v440 = vunpack.c.l.b16 %v425
      %v441 = vunpack.c.l.b16 %v426
      %v442 = vunpack.c.l.b16 %v427
      %v443 = vpack.c.b16 %v440, %v439
      %v444 = vpack.c.b16 %v442, %v441
      %v448 = vsel %vm376, %v423, 0
      %450 = vmatprep.subr.bf16.mxu0 0
      %451 = vmatpush1.bf16.msra.mxu0 0
      %452 = vmatprep.subr.bf16.mxu0 0
      %453 = vmatpush1.bf16.msra.mxu0 0
      %454 = vmatprep.subr.bf16.mxu0 0
      %455 = vmatpush1.bf16.msra.mxu0 0
      %456 = vmatprep.subr.bf16.mxu0 0
      %457 = vmatpush1.bf16.msra.mxu0 0
      %458 = vmatprep.subr.bf16.mxu0 0
      %459 = vmatpush1.bf16.msra.mxu0 0
      %460 = vmatprep.subr.bf16.mxu0 0
      %461 = vmatpush1.bf16.msra.mxu0 0
      %462 = vmatprep.subr.bf16.mxu0 0
      %463 = vmatpush1.bf16.msra.mxu0 %v444
      %464 = vmatprep.subr.bf16.mxu0 0
      %465 = vmatpush1.bf16.msra.mxu0 %v443
      %466 = vmatprep.subr.bf16.mxu0 0
      %467 = vmatpush2.bf16.msra.mxu0 0
      %468 = vmatprep.subr.bf16.mxu0 0
      %469 = vmatpush2.bf16.msra.mxu0 0
      %470 = vmatprep.subr.bf16.mxu0 0
      %471 = vmatpush2.bf16.msra.mxu0 0
      %472 = vmatprep.subr.bf16.mxu0 0
      %473 = vmatpush2.bf16.msra.mxu0 0
      %474 = vmatprep.subr.bf16.mxu0 0
      %475 = vmatpush2.bf16.msra.mxu0 0
      %476 = vmatprep.subr.bf16.mxu0 0
      %477 = vmatpush2.bf16.msra.mxu0 0
      %478 = vmatprep.subr.bf16.mxu0 0
      %479 = vmatpush2.bf16.msra.mxu0 0
      %480 = vmatprep.subr.bf16.mxu0 0
      %481 = vmatpush2.bf16.msra.mxu0 0
      %482 = vmatprep.mubr.bf16.mxu0 0
      %483 = vmatmul.mubr.bf16.gmra.mxu0 %v448
      %v484 = vpop.f32.mrf.mxu0
      %v485 = vadd.f32 %v433, %v484
      %v486 = vpop.f32.mrf.mxu0
      %v487 = vpop.f32.mrf.mxu0
      %v488 = vadd.f32 %v433, %v487
      %v489 = vpop.f32.mrf.mxu0
      %490 = vdwg.mxu0
      %491 = vst [vmem:[%s280] sm:$0xff] %v485
      %492 = vst [vmem:[%s280 + $0x8] sm:$0xff] %v488
      %s493 = smul.u32 2, %s18
      %p494 = scmp.lt.s32.totalorder %s493, 7
      %s495 = scalar_select %p494, %s493, 7
      %s496 = smul.addr %s495, 8
      %s497 = scalar_lea.vmem %s7, %s496
      // Predicated region
      $region49: #{hyperbolic_q_forward.1} parent=47 // pred_check
        %p498 = pneg %p188
      $region50: #{hyperbolic_q_forward.1} parent=47 // pred_check_branch
        %500 = sbr.rel (%p498) target = $region52
      $region51: #{hyperbolic_q_forward.1} parent=47 // pred_region
        %s501 = smul.u32 2, %s18
      $region52: #{hyperbolic_q_forward.1} parent=47 // pred_fallthru
        _
    $region48: #{hyperbolic_q_forward.1} parent=5 // pred_fallthru
      _
    %p502 = scmp.le.s32.totalorder 2, %s13
    // Predicated region
    $region53: #{hyperbolic_q_forward.1} parent=5 // pred_check
      %p503 = pneg %p502
    $region54: #{hyperbolic_q_forward.1} parent=5 // pred_check_branch
      %505 = sbr.rel (%p503) target = $region56
    $region55: #{hyperbolic_q_forward.1} parent=5 // pred_region
      %s506 = ssub.s32 %s13, 2
      // Predicated region
      $region57: #{hyperbolic_q_forward.1} parent=55 // pred_check
        %p507 = pneg %p194
      $region58: #{hyperbolic_q_forward.1} parent=55 // pred_check_branch
        %509 = sbr.rel (%p507) target = $region60
      $region59: #{hyperbolic_q_forward.1} parent=55 // pred_region
        %s510 = smul.u32 2, %s19
        %p511 = scmp.lt.s32.totalorder %s510, 7
        %s512 = scalar_select %p511, %s510, 7
        %s513 = smul.addr %s512, 8
        %s514 = scalar_lea.vmem %s7, %s513
      $region60: #{hyperbolic_q_forward.1} parent=55 // pred_fallthru
        _
    $region56: #{hyperbolic_q_forward.1} parent=5 // pred_fallthru
      _
  $region6: #{hyperbolic_q_forward.1} parent=0 // loop_footer
    %s17 = sadd.s32 1, %s13
  $region7: #{hyperbolic_q_forward.1} parent=0 // loop_footer_branch
    %12 = sbr.rel target = $region3
  $region8: #{hyperbolic_q_forward.1} parent=0 // loop_exit
    _

</llo_original>
